<compile_context>
chip_gen: v7x
topology: tpu7x:2x2x1
jax: 0.10.0
libtpu: 0.0.40
codegen_flags: <defaults>
</compile_context>

<pallas_src>
import jax
import jax.numpy as jnp
from jax.experimental import pallas as pl
from jax.experimental.pallas import tpu as pltpu


def mlp_kernel(w_ref, x_ref, o_ref):
    """Tiny 2-2-1 MLP with batch folded onto (sublane, lane).

    w_ref : SMEM (9,) f32 packed params
            [w1_00, w1_01, w1_10, w1_11, b1_0, b1_1, w2_00, w2_10, b2_0]
            (w1 stored as [in, out], w2 as [in, out])
    x_ref : VMEM (16, TBL)  rows 0..7  = feature-0 batch strips
                             rows 8..15 = feature-1 batch strips
    o_ref : VMEM (8, TBL)   output batch strips
    """
    x0 = x_ref[0:8, :]                       # (8, TBL) feature 0, full vregs
    x1 = x_ref[8:16, :]                      # (8, TBL) feature 1, full vregs

    w1_00 = w_ref[0]
    w1_01 = w_ref[1]
    w1_10 = w_ref[2]
    w1_11 = w_ref[3]
    b1_0 = w_ref[4]
    b1_1 = w_ref[5]
    w2_00 = w_ref[6]
    w2_10 = w_ref[7]
    b2_0 = w_ref[8]

    # Hidden layer (Linear(2,2)) + ReLU -- pure VPU broadcast FMAs.
    h0 = jnp.maximum(x0 * w1_00 + x1 * w1_10 + b1_0, 0.0)   # (8, TBL)
    h1 = jnp.maximum(x0 * w1_01 + x1 * w1_11 + b1_1, 0.0)   # (8, TBL)

    # Output layer (Linear(2,1)) + sigmoid (EUP).
    y = jax.nn.sigmoid(h0 * w2_00 + h1 * w2_10 + b2_0)      # (8, TBL)
    o_ref[...] = y.astype(o_ref.dtype)


def nn_model1_forward(x, w1, b1, w2, b2, *, max_lane_tile=2048):
    """x: [B, 2]; w1: [2, 2] (in,out); b1: [1, 2]; w2: [2, 1]; b2: [1, 1] -> [B, 1]."""
    assert max_lane_tile % 128 == 0
    B = x.shape[0]

    # Pack the 9 parameters into one SMEM-resident f32 vector.
    w_packed = jnp.concatenate(
        [w1.reshape(-1), b1.reshape(-1), w2.reshape(-1), b2.reshape(-1)]
    ).astype(jnp.float32)

    # Fold batch onto (8 sublane strips) x (cols lanes).
    cols_needed = pl.cdiv(B, 8)
    if cols_needed <= max_lane_tile:
        tbl = max(128, pl.cdiv(cols_needed, 128) * 128)
    else:
        tbl = max_lane_tile
    cols = pl.cdiv(cols_needed, tbl) * tbl
    bp = cols * 8

    xt = jnp.transpose(x).astype(jnp.float32)                # [2, B] feature-major
    if bp != B:
        xt = jnp.pad(xt, ((0, 0), (0, bp - B)))              # zero-pad tail
    xf = xt.reshape(16, cols)                                # free reshape (contiguous)

    out = pl.pallas_call(
        mlp_kernel,
        out_shape=jax.ShapeDtypeStruct((8, cols), jnp.float32),
        grid_spec=pl.GridSpec(
            grid=(cols // tbl,),
            in_specs=[
                # Whole packed-parameter vector, resident in SMEM.
                pl.BlockSpec(memory_space=pltpu.MemorySpace.SMEM),
                # Lane-tiled, lane-dense input stream.
                pl.BlockSpec((16, tbl), lambda i: (0, i)),
            ],
            out_specs=pl.BlockSpec((8, tbl), lambda i: (0, i)),
        ),
        compiler_params=pltpu.CompilerParams(
            dimension_semantics=("parallel",)),
    )(w_packed, xf)

    # [8, cols] flattens back into batch order; drop padding.
    return out.reshape(bp)[:B].reshape(B, 1).astype(x.dtype)


def init_params(key):
    # Deterministic init mimicking nn.Linear's uniform(-1/sqrt(fan_in), ...).
    k1, k2, k3, k4 = jax.random.split(key, 4)
    bound = 1.0 / jnp.sqrt(2.0)   # fan_in = 2 for both layers
    w1 = jax.random.uniform(k1, (2, 2), jnp.float32, -bound, bound)  # [in, out]
    b1 = jax.random.uniform(k2, (1, 2), jnp.float32, -bound, bound)
    w2 = jax.random.uniform(k3, (2, 1), jnp.float32, -bound, bound)  # [in, out]
    b2 = jax.random.uniform(k4, (1, 1), jnp.float32, -bound, bound)
    return w1, b1, w2, b2


if __name__ == "__main__":
    key = jax.random.PRNGKey(0)
    kx, kp, kx2 = jax.random.split(key, 3)

    w1, b1, w2, b2 = init_params(kp)

    def ref_fwd(x):
        return jax.nn.sigmoid(jnp.maximum(x @ w1 + b1, 0.0) @ w2 + b2)

    # Small batch (single grid step, padded to one (8, 128) tile).
    B = 8
    x = jax.random.normal(kx, (B, 2), jnp.float32)
    out = jax.block_until_ready(nn_model1_forward(x, w1, b1, w2, b2))
    assert out.shape == (B, 1)
    assert jnp.allclose(out, ref_fwd(x), atol=1e-5), "mismatch vs reference (B=8)"

    # Larger batch exercising the multi-block grid + tail-padding path.
    B2 = 2500
    x2 = jax.random.normal(kx2, (B2, 2), jnp.float32)
    out2 = jax.block_until_ready(
        nn_model1_forward(x2, w1, b1, w2, b2, max_lane_tile=128))
    assert out2.shape == (B2, 1)
    assert jnp.allclose(out2, ref_fwd(x2), atol=1e-5), "mismatch vs reference (B=2500)"

    print("KERNEL_OK")
</pallas_src>

<mosaic_0001>
module attributes {stable_mosaic.version = 11 : i64} {
  func.func @mlp_kernel(%arg0: i32, %arg1: memref<9xf32, #tpu.memory_space<smem>>, %arg2: memref<16x128xf32, #tpu.memory_space<vmem>>, %arg3: memref<8x128xf32, #tpu.memory_space<vmem>>) attributes {dimension_semantics = [#tpu.dimension_semantics<parallel>], iteration_bounds = array<i64: 1>, scalar_prefetch = 0 : i64, scratch_operands = 0 : i64, tpu.core_type = #tpu.core_type<tc>, window_params = [{transform_indices = @transform_0, window_bounds = array<i64: 9>}, {transform_indices = @transform_1, window_bounds = array<i64: 16, 128>}, {transform_indices = @transform_2, window_bounds = array<i64: 8, 128>}]} {
    %c0 = arith.constant 0 : index
    %c0_0 = arith.constant 0 : index
    %0 = vector.load %arg2[%c0, %c0_0] : memref<16x128xf32, #tpu.memory_space<vmem>>, vector<8x128xf32>
    %c8 = arith.constant 8 : index
    %c0_1 = arith.constant 0 : index
    %1 = vector.load %arg2[%c8, %c0_1] : memref<16x128xf32, #tpu.memory_space<vmem>>, vector<8x128xf32>
    %c0_2 = arith.constant 0 : index
    %2 = memref.load %arg1[%c0_2] : memref<9xf32, #tpu.memory_space<smem>>
    %c1 = arith.constant 1 : index
    %3 = memref.load %arg1[%c1] : memref<9xf32, #tpu.memory_space<smem>>
    %c2 = arith.constant 2 : index
    %4 = memref.load %arg1[%c2] : memref<9xf32, #tpu.memory_space<smem>>
    %c3 = arith.constant 3 : index
    %5 = memref.load %arg1[%c3] : memref<9xf32, #tpu.memory_space<smem>>
    %c4 = arith.constant 4 : index
    %6 = memref.load %arg1[%c4] : memref<9xf32, #tpu.memory_space<smem>>
    %c5 = arith.constant 5 : index
    %7 = memref.load %arg1[%c5] : memref<9xf32, #tpu.memory_space<smem>>
    %c6 = arith.constant 6 : index
    %8 = memref.load %arg1[%c6] : memref<9xf32, #tpu.memory_space<smem>>
    %c7 = arith.constant 7 : index
    %9 = memref.load %arg1[%c7] : memref<9xf32, #tpu.memory_space<smem>>
    %c8_3 = arith.constant 8 : index
    %10 = memref.load %arg1[%c8_3] : memref<9xf32, #tpu.memory_space<smem>>
    %11 = vector.broadcast %2 : f32 to vector<8x128xf32>
    %12 = arith.mulf %0, %11 : vector<8x128xf32>
    %13 = vector.broadcast %4 : f32 to vector<8x128xf32>
    %14 = arith.mulf %1, %13 : vector<8x128xf32>
    %15 = arith.addf %12, %14 : vector<8x128xf32>
    %16 = vector.broadcast %6 : f32 to vector<8x128xf32>
    %17 = arith.addf %15, %16 : vector<8x128xf32>
    %cst = arith.constant 0.000000e+00 : f32
    %18 = vector.broadcast %cst : f32 to vector<8x128xf32>
    %19 = arith.maximumf %17, %18 : vector<8x128xf32>
    %20 = vector.broadcast %3 : f32 to vector<8x128xf32>
    %21 = arith.mulf %0, %20 : vector<8x128xf32>
    %22 = vector.broadcast %5 : f32 to vector<8x128xf32>
    %23 = arith.mulf %1, %22 : vector<8x128xf32>
    %24 = arith.addf %21, %23 : vector<8x128xf32>
    %25 = vector.broadcast %7 : f32 to vector<8x128xf32>
    %26 = arith.addf %24, %25 : vector<8x128xf32>
    %cst_4 = arith.constant 0.000000e+00 : f32
    %27 = vector.broadcast %cst_4 : f32 to vector<8x128xf32>
    %28 = arith.maximumf %26, %27 : vector<8x128xf32>
    %29 = vector.broadcast %8 : f32 to vector<8x128xf32>
    %30 = arith.mulf %19, %29 : vector<8x128xf32>
    %31 = vector.broadcast %9 : f32 to vector<8x128xf32>
    %32 = arith.mulf %28, %31 : vector<8x128xf32>
    %33 = arith.addf %30, %32 : vector<8x128xf32>
    %34 = vector.broadcast %10 : f32 to vector<8x128xf32>
    %35 = arith.addf %33, %34 : vector<8x128xf32>
    %36 = arith.negf %35 : vector<8x128xf32>
    %37 = math.exp %36 : vector<8x128xf32>
    %cst_5 = arith.constant 1.000000e+00 : f32
    %38 = vector.broadcast %cst_5 : f32 to vector<8x128xf32>
    %39 = arith.addf %38, %37 : vector<8x128xf32>
    %40 = arith.divf %38, %39 : vector<8x128xf32>
    %c0_6 = arith.constant 0 : index
    %c0_7 = arith.constant 0 : index
    %41 = vector.load %arg3[%c0_6, %c0_7] : memref<8x128xf32, #tpu.memory_space<vmem>>, vector<8x128xf32>
    tpu.vector_store %arg3[%c0_6, %c0_7], %40 {strides = array<i32>} : memref<8x128xf32, #tpu.memory_space<vmem>>, vector<8x128xf32>,
    return
  }
  func.func @transform_0(%arg0: i32) -> i32 {
    %c0_i32 = arith.constant 0 : i32
    %c0_i32_0 = arith.constant 0 : i32
    return %c0_i32 : i32
  }
  func.func @transform_1(%arg0: i32) -> (i32, i32) {
    %c0_i32 = arith.constant 0 : i32
    %c0_i32_0 = arith.constant 0 : i32
    return %c0_i32, %arg0 : i32, i32
  }
  func.func @transform_2(%arg0: i32) -> (i32, i32) {
    %c0_i32 = arith.constant 0 : i32
    %c0_i32_0 = arith.constant 0 : i32
    return %c0_i32, %arg0 : i32, i32
  }
}

</mosaic_0001>

<llo_original>
// kernel: tpu_custom_call.1
$region0: #{tpu_custom_call.1}
  #allocation0 [shape = 'u32[]', space=smem, size = 0x4, offset = 0x4, fixed_abs, tag = 'smem constant byte address 0x4 - core index']
  #allocation1 [shape = 'u32[144,128]{1,0:T(1,128)}', space=vmem, size = 0x12000, scoped, tag = 'internal scratch']
  %s0 = inlined_call_operand.hbm [shape: f32[9], index: 0, kind: input, shape index: {}]
  %s1 = inlined_call_operand.hbm [shape: f32[16,128], index: 1, kind: input, shape index: {}]
  %s2 = inlined_call_operand.hbm [shape: f32[8,128], index: 2, kind: output, shape index: {}]
  %s3 = sld [smem:[#allocation0]]
  $region26: #{tpu_custom_call.1} parent=0
    _
  %s5 = ssub.s32 1, %s3
  %s6 = scalar_select 0, %s5, %s3
  $region1: #{tpu_custom_call.1} parent=0
    #allocation2 [shape = 'u8[512]{0}', space=smem, size = 0x200, scoped, tag = 'input window, operand 0, single buffered']
    #allocation3 [shape = 's32[1]{0}', space=sflag, size = 0x4, scoped, tag = 'scoped memory for tpu_custom_call.1']
    #allocation4 [shape = 's32[1]{0}', space=sflag, size = 0x4, scoped, tag = 'scoped memory for tpu_custom_call.1']
    #allocation5 [shape = 's32[1]{0}', space=sflag, size = 0x4, scoped, tag = 'scoped memory for tpu_custom_call.1']
    #allocation6 [shape = 'u8[8192]{0}', space=vmem, size = 0x2000, scoped, tag = 'input window, operand 1, single buffered']
    #allocation7 [shape = 'u8[4096]{0}', space=vmem, size = 0x1000, scoped, tag = 'output window, operand 0, single buffered']
    %7 = vsyncpa [#allocation5], 0
    %8 = vsyncpa [#allocation3], 0
    %9 = vsyncpa [#allocation4], 0
    // Predicated region
    $region2: #{tpu_custom_call.1} parent=1 // pred_check
      _
    $region3: #{tpu_custom_call.1} parent=1 // pred_check_branch
      %11 = sbr.rel (0) target = $region5
    $region4: #{tpu_custom_call.1} parent=1 // pred_region
      %s13 = ssub.s32 16, 16
      %14 = vsyncadd [#allocation5], %s13
      %17 = dma.hbm_to_smem %s0, 16, [#allocation2], [#allocation5]
    $region5: #{tpu_custom_call.1} parent=1 // pred_fallthru
      _
    // Predicated region
    $region6: #{tpu_custom_call.1} parent=1 // pred_check
      _
    $region7: #{tpu_custom_call.1} parent=1 // pred_check_branch
      %19 = sbr.rel (0) target = $region9
    $region8: #{tpu_custom_call.1} parent=1 // pred_region
      %s21 = ssub.s32 256, 256
      %22 = vsyncadd [#allocation3], %s21
      %s23 = sshll.u32 [#allocation6], 4
      %s24 = int_to_ptr.vmem [resolvable:$true] %s23
      %29 = dma.hbm_to_vmem [thread:$0]  %s1, 256, %s24, [#allocation3], 128, 128, 8
    $region9: #{tpu_custom_call.1} parent=1 // pred_fallthru
      _
    // Predicated region
    $region10: #{tpu_custom_call.1} parent=1 // pred_check
      _
    $region11: #{tpu_custom_call.1} parent=1 // pred_check_branch
      %31 = sbr.rel (0) target = $region13
    $region12: #{tpu_custom_call.1} parent=1 // pred_region
      %32 = dma.done [#allocation5], 16
    $region13: #{tpu_custom_call.1} parent=1 // pred_fallthru
      _
    // Predicated region
    $region14: #{tpu_custom_call.1} parent=1 // pred_check
      _
    $region15: #{tpu_custom_call.1} parent=1 // pred_check_branch
      %34 = sbr.rel (0) target = $region17
    $region16: #{tpu_custom_call.1} parent=1 // pred_region
      %35 = dma.done [#allocation3], 256
    $region17: #{tpu_custom_call.1} parent=1 // pred_fallthru
      _
    %36 = sfence
    %v37 = vld [vmem:[#allocation6] sm:$0xff]
    %v38 = vld [vmem:[#allocation6 + $0x8] sm:$0xff]
    %s39 = sld [smem:[#allocation2]]
    %s40 = sld [smem:[#allocation2 + $0x1]]
    %s41 = sld [smem:[#allocation2 + $0x2]]
    %s42 = sld [smem:[#allocation2 + $0x3]]
    %s43 = sld [smem:[#allocation2 + $0x4]]
    %s44 = sld [smem:[#allocation2 + $0x5]]
    %s45 = sld [smem:[#allocation2 + $0x6]]
    %s46 = sld [smem:[#allocation2 + $0x7]]
    %s47 = sld [smem:[#allocation2 + $0x8]]
    %v48 = vstv %s39
    %v49 = vmul.f32 %v37, %v48
    %v50 = vstv %s41
    %v51 = vmul.f32 %v38, %v50
    %v52 = vadd.f32 %v49, %v51
    %v53 = vstv %s43
    %v54 = vadd.f32 %v52, %v53
    %v55 = vmax.f32 %v54, 0.0
    %v56 = vstv %s40
    %v57 = vmul.f32 %v37, %v56
    %v58 = vstv %s42
    %v59 = vmul.f32 %v38, %v58
    %v60 = vadd.f32 %v57, %v59
    %v61 = vstv %s44
    %v62 = vadd.f32 %v60, %v61
    %v63 = vmax.f32 %v62, 0.0
    %v64 = vstv %s45
    %v65 = vmul.f32 %v55, %v64
    %v66 = vstv %s46
    %v67 = vmul.f32 %v63, %v66
    %v68 = vadd.f32 %v65, %v67
    %v69 = vstv %s47
    %v70 = vadd.f32 %v68, %v69
    %v71 = vxor.u32 %v70, 2147483648
    %v72 = vmul.f32 %v71, 1.442695
    %v73 = vpow.pop %v72
    %v74 = vadd.f32 %v73, 1.0
    %v75 = vrcp.pop %v74
    %v76 = vmul.f32 1.0, %v75
    %77 = vst [vmem:[#allocation7] sm:$0xff] %v76
    // Predicated region
    $region18: #{tpu_custom_call.1} parent=1 // pred_check
      _
    $region19: #{tpu_custom_call.1} parent=1 // pred_check_branch
      %79 = sbr.rel (0) target = $region21
    $region20: #{tpu_custom_call.1} parent=1 // pred_region
      %s81 = ssub.s32 128, 128
      %82 = vsyncadd [#allocation4], %s81
      %s84 = sshll.u32 [#allocation7], 4
      %s85 = int_to_ptr.vmem [resolvable:$true] %s84
      %87 = dma.vmem_to_hbm [thread:$0]  %s85, 128, %s2, [#allocation4]
    $region21: #{tpu_custom_call.1} parent=1 // pred_fallthru
      _
    // Predicated region
    $region22: #{tpu_custom_call.1} parent=1 // pred_check
      _
    $region23: #{tpu_custom_call.1} parent=1 // pred_check_branch
      %89 = sbr.rel (0) target = $region25
    $region24: #{tpu_custom_call.1} parent=1 // pred_region
      %90 = dma.done [#allocation4], 128
    $region25: #{tpu_custom_call.1} parent=1 // pred_fallthru
      _
    %91 = vsyncpa [#allocation3], 1
    %92 = vsyncpa [#allocation4], 1
    %93 = vsyncpa [#allocation5], 1

</llo_original>
